<compile_context>
chip_gen: v7x
topology: tpu7x:2x2x1
jax: 0.10.0
libtpu: 0.0.40
codegen_flags: <defaults>
</compile_context>

<pallas_src>
import jax
import jax.numpy as jnp
from jax import lax
from jax.experimental import pallas as pl
from jax.experimental.pallas import tpu as pltpu


def _wgrad_l1_kernel(x_ref, w_ref, s_ref):
    """s_ref[0,0] = sum(|w * forward_gradient(x)|)  (scalar, SMEM)."""
    x0 = x_ref[0]                                   # (H, W)
    H, W = x0.shape
    # Forward differences via lane / sublane rolls (XLU slot, cheap).
    dx = pltpu.roll(x0, shift=W - 1, axis=1) - x0   # dx[i,j] = x0[i,j+1] - x0[i,j]
    dy = pltpu.roll(x0, shift=H - 1, axis=0) - x0   # dy[i,j] = x0[i+1,j] - x0[i,j]
    # Zero the wrapped boundary column / row (they are zero in the reference).
    col = lax.broadcasted_iota(jnp.int32, (H, W), 1)
    row = lax.broadcasted_iota(jnp.int32, (H, W), 0)
    dx = jnp.where(col == W - 1, 0.0, dx)
    dy = jnp.where(row == H - 1, 0.0, dy)
    s_ref[0, 0] = jnp.sum(jnp.abs(w_ref[0] * dx)) + jnp.sum(jnp.abs(w_ref[1] * dy))


def _outer_kernel(s_ref, xk_ref, xi_ref, bi_ref, o_ref):
    """o[ti, k, j] = (x[i0+ti, j] + b[i0+ti, j]) * x[k, j] + s  for one i-tile.

    s_ref : (1, 1)       SMEM scalar
    xk_ref: (1, H, W)    full x ("k" factor), constant across the grid
    xi_ref: (TI, 1, W)   i-tile of x (size-1 sublane dim -> no relayout needed)
    bi_ref: (TI, 1, W)   matching i-tile of b
    o_ref : (TI, H, W)   output tile
    """
    s = s_ref[0, 0]
    xb = xi_ref[...] + bi_ref[...]                  # (TI, 1, W)
    # (TI,1,W) * (1,H,W) -> (TI,H,W); single fused store.
    o_ref[...] = xb * xk_ref[...] + s


def _pick_row_tile(h, w):
    """Largest power-of-two divisor of h keeping the double-buffered output
    tile comfortably inside default scoped VMEM on every TPU generation."""
    slab_bytes = h * w * 4                 # one (1, H, W) f32 output slab
    budget = 8 * 1024 * 1024               # per output buffer (x2 double-buffer)
    t = 1
    while (t * 2 <= min(h, 256) and h % (t * 2) == 0
           and (t * 2) * slab_bytes <= budget):
        t *= 2
    return t


def max_margin_loss(x, H, b, w, *, row_tile=None):
    """x, b: (1, Hh, Ww) f32; w: (2, Hh, Ww) f32. `H` is unused (as in PyTorch).

    Returns out: (Hh, Hh, Ww) f32.
    """
    del H  # the original PyTorch forward never uses it
    assert x.ndim == 3 and x.shape[0] == 1
    assert b.shape == x.shape and w.shape == (2,) + x.shape[1:]
    _, Hh, Ww = x.shape

    # ---- kernel A: scalar s = || w * forward_gradient(x) ||_1 -> SMEM (1,1)
    s = pl.pallas_call(
        _wgrad_l1_kernel,
        out_shape=jax.ShapeDtypeStruct((1, 1), jnp.float32),
        in_specs=[pl.BlockSpec(memory_space=pltpu.MemorySpace.VMEM),
                  pl.BlockSpec(memory_space=pltpu.MemorySpace.VMEM)],
        out_specs=pl.BlockSpec(memory_space=pltpu.MemorySpace.SMEM),
    )(x, w)

    # ---- kernel B: out[i,k,j] = (x[0,i,j] + b[0,i,j]) * x[0,k,j] + s
    ti = row_tile if row_tile is not None else _pick_row_tile(Hh, Ww)
    assert Hh % ti == 0, "row_tile must divide H"
    grid = (Hh // ti,)

    # Present the i-axis factors with a size-1 sublane dim: (1,Hh,Ww)->(Hh,1,Ww)
    # is a free row-major reshape, and it avoids any in-kernel relayout.
    x_i = x.reshape(Hh, 1, Ww)
    b_i = b.reshape(Hh, 1, Ww)

    out = pl.pallas_call(
        _outer_kernel,
        out_shape=jax.ShapeDtypeStruct((Hh, Hh, Ww), jnp.float32),
        grid=grid,
        in_specs=[
            pl.BlockSpec(memory_space=pltpu.MemorySpace.SMEM),    # s (whole, SMEM)
            pl.BlockSpec((1, Hh, Ww), lambda i: (0, 0, 0)),       # x ("k" factor), fetched once
            pl.BlockSpec((ti, 1, Ww), lambda i: (i, 0, 0)),       # x i-tile
            pl.BlockSpec((ti, 1, Ww), lambda i: (i, 0, 0)),       # b i-tile
        ],
        out_specs=pl.BlockSpec((ti, Hh, Ww), lambda i: (i, 0, 0)),
        compiler_params=pltpu.CompilerParams(
            dimension_semantics=("parallel",),        # shard i-tiles across TCs
            vmem_limit_bytes=48 * 1024 * 1024,        # room for big tiles, < v7x physical VMEM
        ),
    )(s, x, x_i, b_i)
    return out


def _reference(x, b, w):
    """Pure-JAX mirror of the PyTorch forward, for verification."""
    Hh, Ww = x.shape[1], x.shape[2]
    g0 = jnp.zeros((Hh, Ww), jnp.float32).at[:, :-1].set(x[0, :, 1:] - x[0, :, :-1])
    g1 = jnp.zeros((Hh, Ww), jnp.float32).at[:-1, :].set(x[0, 1:, :] - x[0, :-1, :])
    s = jnp.sum(jnp.abs(w[0] * g0)) + jnp.sum(jnp.abs(w[1] * g1))
    xt = jnp.transpose(x, (1, 0, 2))   # (Hh, 1, Ww)
    bt = jnp.transpose(b, (1, 0, 2))
    return xt * x + bt * x + s


if __name__ == "__main__":
    key = jax.random.PRNGKey(0)
    kx, kb, kw = jax.random.split(key, 3)
    # Small but lane-dense shapes (last dim a multiple of 128).
    Hh, Ww = 16, 128
    x = jax.random.normal(kx, (1, Hh, Ww), dtype=jnp.float32)
    b = jax.random.normal(kb, (1, Hh, Ww), dtype=jnp.float32)
    w = jax.random.uniform(kw, (2, Hh, Ww), dtype=jnp.float32)

    ref = _reference(x, b, w)

    # Tiled path (grid of 2) — exercises the pipelined/parallel grid.
    out = jax.block_until_ready(max_margin_loss(x, None, b, w, row_tile=8))
    assert out.shape == (Hh, Hh, Ww)
    assert jnp.allclose(out, ref, rtol=1e-4, atol=1e-4)

    # Auto tile-size path as well.
    out2 = jax.block_until_ready(max_margin_loss(x, None, b, w))
    assert jnp.allclose(out2, ref, rtol=1e-4, atol=1e-4)

    print("KERNEL_OK")
</pallas_src>

<mosaic_0001>
module attributes {stable_mosaic.version = 11 : i64} {
  func.func @_wgrad_l1_kernel(%arg0: memref<1x16x128xf32, #tpu.memory_space<vmem>>, %arg1: memref<2x16x128xf32, #tpu.memory_space<vmem>>, %arg2: memref<1x1xf32, #tpu.memory_space<smem>>) attributes {dimension_semantics = [], scalar_prefetch = 0 : i64, scratch_operands = 0 : i64, tpu.core_type = #tpu.core_type<tc>} {
    %c0 = arith.constant 0 : index
    %c0_0 = arith.constant 0 : index
    %c0_1 = arith.constant 0 : index
    %0 = vector.load %arg0[%c0, %c0_0, %c0_1] : memref<1x16x128xf32, #tpu.memory_space<vmem>>, vector<1x16x128xf32>
    %1 = vector.shape_cast %0 : vector<1x16x128xf32> to vector<16x128xf32>
    %c127_i32 = arith.constant 127 : i32
    %2 = tpu.dynamic_rotate %1 by %c127_i32 dim 1 : vector<16x128xf32>, i32 -> vector<16x128xf32>
    %3 = arith.subf %2, %1 : vector<16x128xf32>
    %c15_i32 = arith.constant 15 : i32
    %4 = tpu.dynamic_rotate %1 by %c15_i32 dim 0 : vector<16x128xf32>, i32 -> vector<16x128xf32>
    %5 = arith.subf %4, %1 : vector<16x128xf32>
    %6 = tpu.iota {dimensions = array<i32: 1>} : vector<16x128xi32>
    %7 = tpu.iota {dimensions = array<i32: 0>} : vector<16x128xi32>
    %c127_i32_2 = arith.constant 127 : i32
    %8 = vector.broadcast %c127_i32_2 : i32 to vector<16x128xi32>
    %9 = arith.cmpi eq, %6, %8 : vector<16x128xi32>
    %cst = arith.constant 0.000000e+00 : f32
    %10 = vector.broadcast %cst : f32 to vector<16x128xf32>
    %11 = arith.select %9, %10, %3 : vector<16x128xi1>, vector<16x128xf32>
    %c15_i32_3 = arith.constant 15 : i32
    %12 = vector.broadcast %c15_i32_3 : i32 to vector<16x128xi32>
    %13 = arith.cmpi eq, %7, %12 : vector<16x128xi32>
    %cst_4 = arith.constant 0.000000e+00 : f32
    %14 = vector.broadcast %cst_4 : f32 to vector<16x128xf32>
    %15 = arith.select %13, %14, %5 : vector<16x128xi1>, vector<16x128xf32>
    %c0_5 = arith.constant 0 : index
    %c0_6 = arith.constant 0 : index
    %c0_7 = arith.constant 0 : index
    %16 = vector.load %arg1[%c0_5, %c0_6, %c0_7] : memref<2x16x128xf32, #tpu.memory_space<vmem>>, vector<1x16x128xf32>
    %17 = vector.shape_cast %16 : vector<1x16x128xf32> to vector<16x128xf32>
    %18 = arith.mulf %17, %11 : vector<16x128xf32>
    %19 = math.absf %18 : vector<16x128xf32>
    %20 = vector.shape_cast %19 : vector<16x128xf32> to vector<1x16x128xf32>
    %cst_8 = arith.constant dense<0.000000e+00> : vector<1xf32>
    %21 = vector.multi_reduction <add>, %20, %cst_8 [1, 2] : vector<1x16x128xf32> to vector<1xf32>
    %22 = vector.shape_cast %21 : vector<1xf32> to vector<1x1x1xf32>
    %23 = vector.extract %22[0, 0, 0] : f32 from vector<1x1x1xf32>
    %c1 = arith.constant 1 : index
    %c0_9 = arith.constant 0 : index
    %c0_10 = arith.constant 0 : index
    %24 = vector.load %arg1[%c1, %c0_9, %c0_10] : memref<2x16x128xf32, #tpu.memory_space<vmem>>, vector<1x16x128xf32>
    %25 = vector.shape_cast %24 : vector<1x16x128xf32> to vector<16x128xf32>
    %26 = arith.mulf %25, %15 : vector<16x128xf32>
    %27 = math.absf %26 : vector<16x128xf32>
    %28 = vector.shape_cast %27 : vector<16x128xf32> to vector<1x16x128xf32>
    %cst_11 = arith.constant dense<0.000000e+00> : vector<1xf32>
    %29 = vector.multi_reduction <add>, %28, %cst_11 [1, 2] : vector<1x16x128xf32> to vector<1xf32>
    %30 = vector.shape_cast %29 : vector<1xf32> to vector<1x1x1xf32>
    %31 = vector.extract %30[0, 0, 0] : f32 from vector<1x1x1xf32>
    %32 = arith.addf %23, %31 : f32
    %c0_12 = arith.constant 0 : index
    %c0_13 = arith.constant 0 : index
    %33 = memref.load %arg2[%c0_12, %c0_13] : memref<1x1xf32, #tpu.memory_space<smem>>
    memref.store %32, %arg2[%c0_12, %c0_13] : memref<1x1xf32, #tpu.memory_space<smem>>
    return
  }
}

</mosaic_0001>

<llo_original>
// kernel: tpu_custom_call.1
$region0: #{tpu_custom_call.1}
  #allocation0 [shape = 'u32[]', space=smem, size = 0x4, offset = 0x4, fixed_abs, tag = 'smem constant byte address 0x4 - core index']
  #allocation1 [shape = 'u32[144,128]{1,0:T(1,128)}', space=vmem, size = 0x12000, scoped, tag = 'internal scratch']
  %s0 = inlined_call_operand.hbm [shape: f32[1,16,128], index: 0, kind: input, shape index: {}]
  %s1 = inlined_call_operand.hbm [shape: f32[2,16,128], index: 1, kind: input, shape index: {}]
  %s2 = inlined_call_operand.hbm [shape: f32[1,1], index: 2, kind: output, shape index: {}]
  %s3 = sld [smem:[#allocation0]]
  $region26: #{tpu_custom_call.1} parent=0
    _
  %s5 = ssub.s32 1, %s3
  %s6 = scalar_select 0, %s5, %s3
  $region1: #{tpu_custom_call.1} parent=0
    #allocation2 [shape = 'u8[8192]{0}', space=vmem, size = 0x2000, scoped, tag = 'input window, operand 0, single buffered']
    #allocation3 [shape = 's32[1]{0}', space=sflag, size = 0x4, scoped, tag = 'scoped memory for tpu_custom_call.1']
    #allocation4 [shape = 's32[1]{0}', space=sflag, size = 0x4, scoped, tag = 'scoped memory for tpu_custom_call.1']
    #allocation5 [shape = 'u8[16384]{0}', space=vmem, size = 0x4000, scoped, tag = 'input window, operand 1, single buffered']
    #allocation6 [shape = 's32[1]{0}', space=sflag, size = 0x4, scoped, tag = 'scoped memory for tpu_custom_call.1']
    #allocation7 [shape = 'u8[512]{0}', space=smem, size = 0x200, scoped, tag = 'output window, operand 0, single buffered']
    %7 = vsyncpa [#allocation3], 0
    %8 = vsyncpa [#allocation6], 0
    %9 = vsyncpa [#allocation4], 0
    // Predicated region
    $region2: #{tpu_custom_call.1} parent=1 // pred_check
      _
    $region3: #{tpu_custom_call.1} parent=1 // pred_check_branch
      %11 = sbr.rel (0) target = $region5
    $region4: #{tpu_custom_call.1} parent=1 // pred_region
      %s13 = ssub.s32 256, 256
      %14 = vsyncadd [#allocation3], %s13
      %s15 = sshll.u32 [#allocation2], 4
      %s16 = int_to_ptr.vmem [resolvable:$true] %s15
      %21 = dma.hbm_to_vmem [thread:$0]  %s0, 256, %s16, [#allocation3], 128, 128, 8
    $region5: #{tpu_custom_call.1} parent=1 // pred_fallthru
      _
    // Predicated region
    $region6: #{tpu_custom_call.1} parent=1 // pred_check
      _
    $region7: #{tpu_custom_call.1} parent=1 // pred_check_branch
      %23 = sbr.rel (0) target = $region9
    $region8: #{tpu_custom_call.1} parent=1 // pred_region
      %s25 = ssub.s32 512, 512
      %26 = vsyncadd [#allocation6], %s25
      %s27 = sshll.u32 [#allocation5], 4
      %s28 = int_to_ptr.vmem [resolvable:$true] %s27
      %33 = dma.hbm_to_vmem [thread:$0]  %s1, 512, %s28, [#allocation6], 128, 128, 8
    $region9: #{tpu_custom_call.1} parent=1 // pred_fallthru
      _
    // Predicated region
    $region10: #{tpu_custom_call.1} parent=1 // pred_check
      _
    $region11: #{tpu_custom_call.1} parent=1 // pred_check_branch
      %35 = sbr.rel (0) target = $region13
    $region12: #{tpu_custom_call.1} parent=1 // pred_region
      %36 = dma.done [#allocation3], 256
    $region13: #{tpu_custom_call.1} parent=1 // pred_fallthru
      _
    // Predicated region
    $region14: #{tpu_custom_call.1} parent=1 // pred_check
      _
    $region15: #{tpu_custom_call.1} parent=1 // pred_check_branch
      %38 = sbr.rel (0) target = $region17
    $region16: #{tpu_custom_call.1} parent=1 // pred_region
      %39 = dma.done [#allocation6], 512
    $region17: #{tpu_custom_call.1} parent=1 // pred_fallthru
      _
    %v40 = vld [vmem:[#allocation2] sm:$0xff]
    %v41 = vld [vmem:[#allocation2 + $0x8] sm:$0xff]
    %42 = vrot.lane.b32.xlu0 %v40, 127
    %v43 = vpop.permute.xlu0 %42
    %44 = vrot.lane.b32.xlu0 %v41, 127
    %v45 = vpop.permute.xlu0 %44
    %v46 = vsub.f32 %v43, %v40
    %v47 = vsub.f32 %v45, %v41
    %v48 = vrot.slane %v40, 1
    %v49 = vrot.slane %v41, 1
    %v50 = vlaneseq
    %v51 = vshrl.u32 %v50, 7
    %vm52 = vcmp.lt.s32.totalorder %v51, 7
    %v53 = vsel %vm52, %v48, %v49
    %v54 = vsel %vm52, %v49, %v48
    %v55 = vsub.f32 %v53, %v40
    %v56 = vsub.f32 %v54, %v41
    %v57 = vlaneseq
    %v58 = vand.u32 %v57, 127
    %v59 = vadd.s32 %v51, 8
    %vm60 = vcmp.eq.s32.totalorder %v58, 127
    %v61 = vsel %vm60, 0.0, %v46
    %v62 = vsel %vm60, 0.0, %v47
    %vm63 = vcmp.eq.s32.totalorder %v51, 15
    %vm64 = vcmp.eq.s32.totalorder %v59, 15
    %v65 = vsel %vm63, 0.0, %v55
    %v66 = vsel %vm64, 0.0, %v56
    %v67 = vld [vmem:[#allocation5] sm:$0xff]
    %v68 = vld [vmem:[#allocation5 + $0x8] sm:$0xff]
    %v69 = vmul.f32 %v67, %v61
    %v70 = vmul.f32 %v68, %v62
    %v71 = vand.u32 2147483647, %v69
    %v72 = vand.u32 2147483647, %v70
    %v73 = vadd.f32 %v71, %v72
    %74 = vadd.xlane.f32.xlu0 %v73
    %v75 = vpop.xlane.xlu0 %74
    %v76 = vrot.slane %v75, 4
    %v77 = vadd.f32 %v75, %v76
    %v78 = vrot.slane %v77, 2
    %v79 = vadd.f32 %v77, %v78
    %v80 = vrot.slane %v79, 1
    %v81 = vadd.f32 %v79, %v80
    %s82 = vtos %v81
    %s83 = scalar_lea.vmem [#allocation5], 16
    %v84 = vld [vmem:[%s83] sm:$0xff]
    %v85 = vld [vmem:[%s83 + $0x8] sm:$0xff]
    %v86 = vmul.f32 %v84, %v65
    %v87 = vmul.f32 %v85, %v66
    %v88 = vand.u32 2147483647, %v86
    %v89 = vand.u32 2147483647, %v87
    %v90 = vadd.f32 %v88, %v89
    %91 = vadd.xlane.f32.xlu0 %v90
    %v92 = vpop.xlane.xlu0 %91
    %v93 = vrot.slane %v92, 4
    %v94 = vadd.f32 %v92, %v93
    %v95 = vrot.slane %v94, 2
    %v96 = vadd.f32 %v94, %v95
    %v97 = vrot.slane %v96, 1
    %v98 = vadd.f32 %v96, %v97
    %s99 = vtos %v98
    %s100 = sadd.f32 %s82, %s99
    %s101 = scalar_lea.smem [#allocation7], 0
    %102 = sst [smem:[%s101]] %s100
    // Predicated region
    $region18: #{tpu_custom_call.1} parent=1 // pred_check
      _
    $region19: #{tpu_custom_call.1} parent=1 // pred_check_branch
      %104 = sbr.rel (0) target = $region21
    $region20: #{tpu_custom_call.1} parent=1 // pred_region
      %s106 = ssub.s32 16, 16
      %107 = vsyncadd [#allocation4], %s106
      %110 = dma.smem_to_hbm [#allocation7], 16, %s2, [#allocation4]
    $region21: #{tpu_custom_call.1} parent=1 // pred_fallthru
      _
    // Predicated region
    $region22: #{tpu_custom_call.1} parent=1 // pred_check
      _
    $region23: #{tpu_custom_call.1} parent=1 // pred_check_branch
      %112 = sbr.rel (0) target = $region25
    $region24: #{tpu_custom_call.1} parent=1 // pred_region
      %113 = dma.done [#allocation4], 16
    $region25: #{tpu_custom_call.1} parent=1 // pred_fallthru
      _
    %114 = sfence
    %115 = vsyncpa [#allocation3], 1
    %116 = vsyncpa [#allocation6], 1
    %117 = vsyncpa [#allocation4], 1

</llo_original>
